<compile_context>
chip_gen: v7x
topology: tpu7x:2x2x1
jax: 0.10.0
libtpu: 0.0.40
codegen_flags: <defaults>
</compile_context>

<pallas_src>
import jax
import jax.numpy as jnp
from jax.experimental import pallas as pl
from jax.experimental.pallas import tpu as pltpu

SELU_ALPHA = 1.6732632423543772
SELU_SCALE = 1.0507009873554805


def _selu(v):
    # f32 math; clamp before exp so the discarded positive branch can't overflow.
    neg = SELU_ALPHA * (jnp.exp(jnp.minimum(v, 0.0)) - 1.0)
    return SELU_SCALE * jnp.where(v > 0, v, neg)


def mlp_kernel(x_ref, w1_ref, b1_ref, w2_ref, b2_ref, w3_ref, b3_ref,
               w4t_ref, b4_ref, o_ref):
    # MXU dots take bf16 operands (weights are pre-cast in the wrapper),
    # accumulate in f32; biases / activations stay f32.
    x = x_ref[...].astype(jnp.bfloat16)
    h = _selu(jnp.dot(x, w1_ref[...],
                      preferred_element_type=jnp.float32) + b1_ref[...])
    h = _selu(jnp.dot(h.astype(jnp.bfloat16), w2_ref[...],
                      preferred_element_type=jnp.float32) + b2_ref[...])
    h = _selu(jnp.dot(h.astype(jnp.bfloat16), w3_ref[...],
                      preferred_element_type=jnp.float32) + b3_ref[...])
    # Final layer has out_dim=1: do it on the VPU/XLU (mul + lane reduce)
    # instead of a <1%-utilization 1-column MXU matmul.
    out = jnp.sum(h * w4t_ref[...], axis=-1, keepdims=True) + b4_ref[...]
    o_ref[...] = out.astype(o_ref.dtype)


def _round_up(n, m):
    return ((n + m - 1) // m) * m


def prepare_params(params, lane=128):
    """One-time layout prep: zero-pad hidden dims to the 128-lane width,
    cast MXU weights to bf16, and store the final weight as a (1, L3) row."""
    (w1, b1), (w2, b2), (w3, b3), (w4, b4) = params
    f = w1.shape[0]
    l1 = _round_up(w1.shape[1], lane)
    l2 = _round_up(w2.shape[1], lane)
    l3 = _round_up(w3.shape[1], lane)

    def pad(a, shape):
        return jnp.pad(a, [(0, t - s) for t, s in zip(shape, a.shape)])

    w1p = pad(w1, (f, l1)).astype(jnp.bfloat16)
    w2p = pad(w2, (l1, l2)).astype(jnp.bfloat16)
    w3p = pad(w3, (l2, l3)).astype(jnp.bfloat16)
    w4t = pad(w4.T, (1, l3)).astype(jnp.float32)   # row vector for VPU reduce
    b1p = pad(b1, (1, l1)).astype(jnp.float32)
    b2p = pad(b2, (1, l2)).astype(jnp.float32)
    b3p = pad(b3, (1, l3)).astype(jnp.float32)
    b4p = b4.astype(jnp.float32)                    # (1, 1)
    return (w1p, b1p, w2p, b2p, w3p, b3p, w4t, b4p)


def mlp_forward(x, kparams, *, tile_b=None):
    w1, b1, w2, b2, w3, b3, w4t, b4 = kparams
    B, F = x.shape
    if tile_b is None:
        # Small batch: one grid step (no per-step overhead). Large batch:
        # 256-row tiles amortize overhead and keep multiple parallel steps.
        tile_b = B if B <= 256 else 256
    assert B % tile_b == 0, "batch must be divisible by tile_b"

    def const_spec(arr):
        # whole array, same block every grid step
        nd = arr.ndim
        return pl.BlockSpec(arr.shape, lambda i, _nd=nd: (0,) * _nd)

    grid = (B // tile_b,)
    return pl.pallas_call(
        mlp_kernel,
        out_shape=jax.ShapeDtypeStruct((B, 1), jnp.float32),
        grid_spec=pltpu.PrefetchScalarGridSpec(
            num_scalar_prefetch=0,
            grid=grid,
            in_specs=[
                pl.BlockSpec((tile_b, F), lambda i: (i, 0)),
                const_spec(w1), const_spec(b1),
                const_spec(w2), const_spec(b2),
                const_spec(w3), const_spec(b3),
                const_spec(w4t), const_spec(b4),
            ],
            out_specs=pl.BlockSpec((tile_b, 1), lambda i: (i, 0)),
        ),
        compiler_params=pltpu.CompilerParams(
            dimension_semantics=("parallel",)),
    )(x, w1, b1, w2, b2, w3, b3, w4t, b4)


def init_params(key, num_features, layer_1, layer_2, layer_3):
    dims = [(num_features, layer_1), (layer_1, layer_2),
            (layer_2, layer_3), (layer_3, 1)]
    params = []
    for (fan_in, fan_out) in dims:
        key, kw, kb = jax.random.split(key, 3)
        bound = 1.0 / jnp.sqrt(fan_in)
        w = jax.random.uniform(kw, (fan_in, fan_out), jnp.float32,
                               minval=-bound, maxval=bound)
        b = jax.random.uniform(kb, (1, fan_out), jnp.float32,
                               minval=-bound, maxval=bound)
        params.append((w, b))
    return params


def reference_forward(x, params):
    (w1, b1), (w2, b2), (w3, b3), (w4, b4) = params
    h = jax.nn.selu(x @ w1 + b1)
    h = jax.nn.selu(h @ w2 + b2)
    h = jax.nn.selu(h @ w3 + b3)
    return h @ w4 + b4


if __name__ == "__main__":
    num_features, layer_1, layer_2, layer_3 = 32, 64, 48, 32
    batch = 16

    key = jax.random.PRNGKey(0)
    key, kx = jax.random.split(key)
    x = jax.random.normal(kx, (batch, num_features), jnp.float32)
    params = init_params(key, num_features, layer_1, layer_2, layer_3)
    kparams = prepare_params(params)

    out = mlp_forward(x, kparams)
    out = jax.block_until_ready(out)

    ref = reference_forward(x, params)
    assert out.shape == (batch, 1)
    # bf16 MXU operands => relaxed tolerance vs the f32 reference.
    assert jnp.allclose(out, ref, atol=3e-2, rtol=3e-2), (
        f"max abs diff {jnp.max(jnp.abs(out - ref))}")
    print("KERNEL_OK")
</pallas_src>

<mosaic_0001>
module attributes {stable_mosaic.version = 11 : i64} {
  func.func @mlp_kernel(%arg0: i32, %arg1: memref<16x32xf32, #tpu.memory_space<vmem>>, %arg2: memref<32x128xbf16, #tpu.memory_space<vmem>>, %arg3: memref<1x128xf32, #tpu.memory_space<vmem>>, %arg4: memref<128x128xbf16, #tpu.memory_space<vmem>>, %arg5: memref<1x128xf32, #tpu.memory_space<vmem>>, %arg6: memref<128x128xbf16, #tpu.memory_space<vmem>>, %arg7: memref<1x128xf32, #tpu.memory_space<vmem>>, %arg8: memref<1x128xf32, #tpu.memory_space<vmem>>, %arg9: memref<1x1xf32, #tpu.memory_space<vmem>>, %arg10: memref<16x1xf32, #tpu.memory_space<vmem>>) attributes {dimension_semantics = [#tpu.dimension_semantics<parallel>], iteration_bounds = array<i64: 1>, scalar_prefetch = 0 : i64, scratch_operands = 0 : i64, tpu.core_type = #tpu.core_type<tc>, window_params = [{transform_indices = @transform_0, window_bounds = array<i64: 16, 32>}, {pipeline_mode = #tpu.pipeline_mode<synchronous>, transform_indices = @transform_1, window_bounds = array<i64: 32, 128>}, {pipeline_mode = #tpu.pipeline_mode<synchronous>, transform_indices = @transform_2, window_bounds = array<i64: 1, 128>}, {pipeline_mode = #tpu.pipeline_mode<synchronous>, transform_indices = @transform_3, window_bounds = array<i64: 128, 128>}, {pipeline_mode = #tpu.pipeline_mode<synchronous>, transform_indices = @transform_4, window_bounds = array<i64: 1, 128>}, {pipeline_mode = #tpu.pipeline_mode<synchronous>, transform_indices = @transform_5, window_bounds = array<i64: 128, 128>}, {pipeline_mode = #tpu.pipeline_mode<synchronous>, transform_indices = @transform_6, window_bounds = array<i64: 1, 128>}, {pipeline_mode = #tpu.pipeline_mode<synchronous>, transform_indices = @transform_7, window_bounds = array<i64: 1, 128>}, {pipeline_mode = #tpu.pipeline_mode<synchronous>, transform_indices = @transform_8, window_bounds = array<i64: 1, 1>}, {transform_indices = @transform_9, window_bounds = array<i64: 16, 1>}]} {
    %c0 = arith.constant 0 : index
    %c0_0 = arith.constant 0 : index
    %0 = vector.load %arg1[%c0, %c0_0] : memref<16x32xf32, #tpu.memory_space<vmem>>, vector<16x32xf32>
    %1 = arith.truncf %0 : vector<16x32xf32> to vector<16x32xbf16>
    %c0_1 = arith.constant 0 : index
    %c0_2 = arith.constant 0 : index
    %2 = vector.load %arg2[%c0_1, %c0_2] : memref<32x128xbf16, #tpu.memory_space<vmem>>, vector<32x128xbf16>
    %cst = arith.constant dense<0.000000e+00> : vector<16x128xf32>
    %3 = tpu.matmul %1, %2, %cst {dimension_numbers = #tpu.dot_dimension_numbers<[1], [0], [0], [1], [0, 0, 1, 1], [], []>} : vector<16x32xbf16>, vector<32x128xbf16>, vector<16x128xf32> -> vector<16x128xf32>
    %c0_3 = arith.constant 0 : index
    %c0_4 = arith.constant 0 : index
    %4 = vector.load %arg3[%c0_3, %c0_4] : memref<1x128xf32, #tpu.memory_space<vmem>>, vector<1x128xf32>
    %5 = vector.broadcast %4 : vector<1x128xf32> to vector<16x128xf32>
    %6 = arith.addf %3, %5 : vector<16x128xf32>
    %cst_5 = arith.constant 0.000000e+00 : f32
    %7 = vector.broadcast %cst_5 : f32 to vector<16x128xf32>
    %8 = arith.minimumf %6, %7 : vector<16x128xf32>
    %9 = math.exp %8 : vector<16x128xf32>
    %cst_6 = arith.constant 1.000000e+00 : f32
    %10 = vector.broadcast %cst_6 : f32 to vector<16x128xf32>
    %11 = arith.subf %9, %10 : vector<16x128xf32>
    %cst_7 = arith.constant 1.67326319 : f32
    %12 = vector.broadcast %cst_7 : f32 to vector<16x128xf32>
    %13 = arith.mulf %12, %11 : vector<16x128xf32>
    %cst_8 = arith.constant 0.000000e+00 : f32
    %14 = vector.broadcast %cst_8 : f32 to vector<16x128xf32>
    %15 = arith.cmpf ogt, %6, %14 : vector<16x128xf32>
    %16 = arith.select %15, %6, %13 : vector<16x128xi1>, vector<16x128xf32>
    %cst_9 = arith.constant 1.05070102 : f32
    %17 = vector.broadcast %cst_9 : f32 to vector<16x128xf32>
    %18 = arith.mulf %17, %16 : vector<16x128xf32>
    %19 = arith.truncf %18 : vector<16x128xf32> to vector<16x128xbf16>
    %c0_10 = arith.constant 0 : index
    %c0_11 = arith.constant 0 : index
    %20 = vector.load %arg4[%c0_10, %c0_11] : memref<128x128xbf16, #tpu.memory_space<vmem>>, vector<128x128xbf16>
    %cst_12 = arith.constant dense<0.000000e+00> : vector<16x128xf32>
    %21 = tpu.matmul %19, %20, %cst_12 {dimension_numbers = #tpu.dot_dimension_numbers<[1], [0], [0], [1], [0, 0, 1, 1], [], []>} : vector<16x128xbf16>, vector<128x128xbf16>, vector<16x128xf32> -> vector<16x128xf32>
    %c0_13 = arith.constant 0 : index
    %c0_14 = arith.constant 0 : index
    %22 = vector.load %arg5[%c0_13, %c0_14] : memref<1x128xf32, #tpu.memory_space<vmem>>, vector<1x128xf32>
    %23 = vector.broadcast %22 : vector<1x128xf32> to vector<16x128xf32>
    %24 = arith.addf %21, %23 : vector<16x128xf32>
    %cst_15 = arith.constant 0.000000e+00 : f32
    %25 = vector.broadcast %cst_15 : f32 to vector<16x128xf32>
    %26 = arith.minimumf %24, %25 : vector<16x128xf32>
    %27 = math.exp %26 : vector<16x128xf32>
    %cst_16 = arith.constant 1.000000e+00 : f32
    %28 = vector.broadcast %cst_16 : f32 to vector<16x128xf32>
    %29 = arith.subf %27, %28 : vector<16x128xf32>
    %cst_17 = arith.constant 1.67326319 : f32
    %30 = vector.broadcast %cst_17 : f32 to vector<16x128xf32>
    %31 = arith.mulf %30, %29 : vector<16x128xf32>
    %cst_18 = arith.constant 0.000000e+00 : f32
    %32 = vector.broadcast %cst_18 : f32 to vector<16x128xf32>
    %33 = arith.cmpf ogt, %24, %32 : vector<16x128xf32>
    %34 = arith.select %33, %24, %31 : vector<16x128xi1>, vector<16x128xf32>
    %cst_19 = arith.constant 1.05070102 : f32
    %35 = vector.broadcast %cst_19 : f32 to vector<16x128xf32>
    %36 = arith.mulf %35, %34 : vector<16x128xf32>
    %37 = arith.truncf %36 : vector<16x128xf32> to vector<16x128xbf16>
    %c0_20 = arith.constant 0 : index
    %c0_21 = arith.constant 0 : index
    %38 = vector.load %arg6[%c0_20, %c0_21] : memref<128x128xbf16, #tpu.memory_space<vmem>>, vector<128x128xbf16>
    %cst_22 = arith.constant dense<0.000000e+00> : vector<16x128xf32>
    %39 = tpu.matmul %37, %38, %cst_22 {dimension_numbers = #tpu.dot_dimension_numbers<[1], [0], [0], [1], [0, 0, 1, 1], [], []>} : vector<16x128xbf16>, vector<128x128xbf16>, vector<16x128xf32> -> vector<16x128xf32>
    %c0_23 = arith.constant 0 : index
    %c0_24 = arith.constant 0 : index
    %40 = vector.load %arg7[%c0_23, %c0_24] : memref<1x128xf32, #tpu.memory_space<vmem>>, vector<1x128xf32>
    %41 = vector.broadcast %40 : vector<1x128xf32> to vector<16x128xf32>
    %42 = arith.addf %39, %41 : vector<16x128xf32>
    %cst_25 = arith.constant 0.000000e+00 : f32
    %43 = vector.broadcast %cst_25 : f32 to vector<16x128xf32>
    %44 = arith.minimumf %42, %43 : vector<16x128xf32>
    %45 = math.exp %44 : vector<16x128xf32>
    %cst_26 = arith.constant 1.000000e+00 : f32
    %46 = vector.broadcast %cst_26 : f32 to vector<16x128xf32>
    %47 = arith.subf %45, %46 : vector<16x128xf32>
    %cst_27 = arith.constant 1.67326319 : f32
    %48 = vector.broadcast %cst_27 : f32 to vector<16x128xf32>
    %49 = arith.mulf %48, %47 : vector<16x128xf32>
    %cst_28 = arith.constant 0.000000e+00 : f32
    %50 = vector.broadcast %cst_28 : f32 to vector<16x128xf32>
    %51 = arith.cmpf ogt, %42, %50 : vector<16x128xf32>
    %52 = arith.select %51, %42, %49 : vector<16x128xi1>, vector<16x128xf32>
    %cst_29 = arith.constant 1.05070102 : f32
    %53 = vector.broadcast %cst_29 : f32 to vector<16x128xf32>
    %54 = arith.mulf %53, %52 : vector<16x128xf32>
    %c0_30 = arith.constant 0 : index
    %c0_31 = arith.constant 0 : index
    %55 = vector.load %arg8[%c0_30, %c0_31] : memref<1x128xf32, #tpu.memory_space<vmem>>, vector<1x128xf32>
    %56 = vector.broadcast %55 : vector<1x128xf32> to vector<16x128xf32>
    %57 = arith.mulf %54, %56 : vector<16x128xf32>
    %cst_32 = arith.constant dense<0.000000e+00> : vector<16xf32>
    %58 = vector.multi_reduction <add>, %57, %cst_32 [1] : vector<16x128xf32> to vector<16xf32>
    %59 = vector.shape_cast %58 : vector<16xf32> to vector<16x1xf32>
    %c0_33 = arith.constant 0 : index
    %c0_34 = arith.constant 0 : index
    %60 = vector.load %arg9[%c0_33, %c0_34] : memref<1x1xf32, #tpu.memory_space<vmem>>, vector<1x1xf32>
    %61 = vector.broadcast %60 : vector<1x1xf32> to vector<16x1xf32>
    %62 = arith.addf %59, %61 : vector<16x1xf32>
    %c0_35 = arith.constant 0 : index
    %c0_36 = arith.constant 0 : index
    %63 = vector.load %arg10[%c0_35, %c0_36] : memref<16x1xf32, #tpu.memory_space<vmem>>, vector<16x1xf32>
    tpu.vector_store %arg10[%c0_35, %c0_36], %62 {strides = array<i32>} : memref<16x1xf32, #tpu.memory_space<vmem>>, vector<16x1xf32>,
    return
  }
  func.func @transform_0(%arg0: i32) -> (i32, i32) {
    %c0_i32 = arith.constant 0 : i32
    %c0_i32_0 = arith.constant 0 : i32
    return %arg0, %c0_i32 : i32, i32
  }
  func.func @transform_1(%arg0: i32) -> (i32, i32) {
    %c0_i32 = arith.constant 0 : i32
    %c0_i32_0 = arith.constant 0 : i32
    %c0_i32_1 = arith.constant 0 : i32
    return %c0_i32, %c0_i32_0 : i32, i32
  }
  func.func @transform_2(%arg0: i32) -> (i32, i32) {
    %c0_i32 = arith.constant 0 : i32
    %c0_i32_0 = arith.constant 0 : i32
    %c0_i32_1 = arith.constant 0 : i32
    return %c0_i32, %c0_i32_0 : i32, i32
  }
  func.func @transform_3(%arg0: i32) -> (i32, i32) {
    %c0_i32 = arith.constant 0 : i32
    %c0_i32_0 = arith.constant 0 : i32
    %c0_i32_1 = arith.constant 0 : i32
    return %c0_i32, %c0_i32_0 : i32, i32
  }
  func.func @transform_4(%arg0: i32) -> (i32, i32) {
    %c0_i32 = arith.constant 0 : i32
    %c0_i32_0 = arith.constant 0 : i32
    %c0_i32_1 = arith.constant 0 : i32
    return %c0_i32, %c0_i32_0 : i32, i32
  }
  func.func @transform_5(%arg0: i32) -> (i32, i32) {
    %c0_i32 = arith.constant 0 : i32
    %c0_i32_0 = arith.constant 0 : i32
    %c0_i32_1 = arith.constant 0 : i32
    return %c0_i32, %c0_i32_0 : i32, i32
  }
  func.func @transform_6(%arg0: i32) -> (i32, i32) {
    %c0_i32 = arith.constant 0 : i32
    %c0_i32_0 = arith.constant 0 : i32
    %c0_i32_1 = arith.constant 0 : i32
    return %c0_i32, %c0_i32_0 : i32, i32
  }
  func.func @transform_7(%arg0: i32) -> (i32, i32) {
    %c0_i32 = arith.constant 0 : i32
    %c0_i32_0 = arith.constant 0 : i32
    %c0_i32_1 = arith.constant 0 : i32
    return %c0_i32, %c0_i32_0 : i32, i32
  }
  func.func @transform_8(%arg0: i32) -> (i32, i32) {
    %c0_i32 = arith.constant 0 : i32
    %c0_i32_0 = arith.constant 0 : i32
    %c0_i32_1 = arith.constant 0 : i32
    return %c0_i32, %c0_i32_0 : i32, i32
  }
  func.func @transform_9(%arg0: i32) -> (i32, i32) {
    %c0_i32 = arith.constant 0 : i32
    %c0_i32_0 = arith.constant 0 : i32
    return %arg0, %c0_i32 : i32, i32
  }
}

</mosaic_0001>

<llo_original>
// kernel: tpu_custom_call.1
$region0: #{tpu_custom_call.1}
  #allocation0 [shape = 'u32[]', space=smem, size = 0x4, offset = 0x4, fixed_abs, tag = 'smem constant byte address 0x4 - core index']
  #allocation1 [shape = 'u32[144,128]{1,0:T(1,128)}', space=vmem, size = 0x12000, scoped, tag = 'internal scratch']
  #allocation2 [shape = 'f32[1,1]{1,0:T(1,128)S(1)}', space=vmem, size = 0x200, scoped, tag = 'scoped memory for tpu_custom_call.1']
  %s0 = inlined_call_operand.hbm [shape: f32[16,32], index: 0, kind: input, shape index: {}]
  %s1 = inlined_call_operand.hbm [shape: bf16[32,128], index: 1, kind: input, shape index: {}]
  %s2 = inlined_call_operand.vmem [shape: f32[1,128], index: 2, kind: input, shape index: {}]
  %s3 = inlined_call_operand.hbm [shape: bf16[128,128], index: 3, kind: input, shape index: {}]
  %s4 = inlined_call_operand.vmem [shape: f32[1,128], index: 4, kind: input, shape index: {}]
  %s5 = inlined_call_operand.hbm [shape: bf16[128,128], index: 5, kind: input, shape index: {}]
  %s6 = inlined_call_operand.vmem [shape: f32[1,128], index: 6, kind: input, shape index: {}]
  %s7 = inlined_call_operand.vmem [shape: f32[1,128], index: 7, kind: input, shape index: {}]
  %s8 = inlined_call_operand.<no memory space> [shape: f32[1,1], index: 8, kind: input, shape index: {}]
  %s9 = inlined_call_operand.vmem [shape: f32[16,1], index: 9, kind: output, shape index: {}]
  %s10 = sld [smem:[#allocation0]]
  $region62: #{tpu_custom_call.1} parent=0
    _
  %s12 = ssub.s32 1, %s10
  %s13 = scalar_select 0, %s12, %s10
  %v14 = vstv %s8
  %15 = vst [vmem:[#allocation2] sm:$0x1] %v14
  $region1: #{tpu_custom_call.1} parent=0
    #allocation3 [shape = 'u8[8192]{0}', space=vmem, size = 0x2000, scoped, tag = 'input window, operand 0, single buffered']
    #allocation4 [shape = 's32[1]{0}', space=sflag, size = 0x4, scoped, tag = 'scoped memory for tpu_custom_call.1']
    #allocation5 [shape = 'u8[8192]{0}', space=vmem, size = 0x2000, scoped, tag = 'input window, operand 1, single buffered']
    #allocation6 [shape = 's32[1]{0}', space=sflag, size = 0x4, scoped, tag = 'scoped memory for tpu_custom_call.1']
    #allocation7 [shape = 'u8[32768]{0}', space=vmem, size = 0x8000, scoped, tag = 'input window, operand 3, single buffered']
    #allocation8 [shape = 'u8[32768]{0}', space=vmem, size = 0x8000, scoped, tag = 'input window, operand 5, single buffered']
    #allocation9 [shape = 's32[1]{0}', space=sflag, size = 0x4, scoped, tag = 'scoped memory for tpu_custom_call.1']
    %16 = vsyncpa [#allocation4], 0
    %17 = vsyncpa [#allocation6], 0
    %18 = vsyncpa [#allocation9], 0
    // Predicated region
    $region2: #{tpu_custom_call.1} parent=1 // pred_check
      _
    $region3: #{tpu_custom_call.1} parent=1 // pred_check_branch
      %20 = sbr.rel (0) target = $region5
    $region4: #{tpu_custom_call.1} parent=1 // pred_region
      %s22 = ssub.s32 256, 256
      %23 = vsyncadd [#allocation4], %s22
      %s24 = sshll.u32 [#allocation3], 4
      %s25 = int_to_ptr.vmem [resolvable:$true] %s24
      %30 = dma.hbm_to_vmem [thread:$0]  %s0, 256, %s25, [#allocation4], 128, 128, 8
    $region5: #{tpu_custom_call.1} parent=1 // pred_fallthru
      _
    // Predicated region
    $region6: #{tpu_custom_call.1} parent=1 // pred_check
      _
    $region7: #{tpu_custom_call.1} parent=1 // pred_check_branch
      %32 = sbr.rel (0) target = $region9
    $region8: #{tpu_custom_call.1} parent=1 // pred_region
      %s34 = ssub.s32 256, 256
      %35 = vsyncadd [#allocation6], %s34
      %s36 = sshll.u32 [#allocation5], 4
      %s37 = int_to_ptr.vmem [resolvable:$true] %s36
      %42 = dma.hbm_to_vmem [thread:$0]  %s1, 256, %s37, [#allocation6], 64, 64, 4
    $region9: #{tpu_custom_call.1} parent=1 // pred_fallthru
      _
    // Predicated region
    $region10: #{tpu_custom_call.1} parent=1 // pred_check
      _
    $region11: #{tpu_custom_call.1} parent=1 // pred_check_branch
      %44 = sbr.rel (0) target = $region13
    $region12: #{tpu_custom_call.1} parent=1 // pred_region
      _
    $region13: #{tpu_custom_call.1} parent=1 // pred_fallthru
      _
    // Predicated region
    $region14: #{tpu_custom_call.1} parent=1 // pred_check
      _
    $region15: #{tpu_custom_call.1} parent=1 // pred_check_branch
      %46 = sbr.rel (0) target = $region17
    $region16: #{tpu_custom_call.1} parent=1 // pred_region
      %s48 = ssub.s32 1024, 1024
      %49 = vsyncadd [#allocation6], %s48
      %s50 = sshll.u32 [#allocation7], 4
      %s51 = int_to_ptr.vmem [resolvable:$true] %s50
      %56 = dma.hbm_to_vmem [thread:$0]  %s3, 1024, %s51, [#allocation6], 64, 64, 4
    $region17: #{tpu_custom_call.1} parent=1 // pred_fallthru
      _
    // Predicated region
    $region18: #{tpu_custom_call.1} parent=1 // pred_check
      _
    $region19: #{tpu_custom_call.1} parent=1 // pred_check_branch
      %58 = sbr.rel (0) target = $region21
    $region20: #{tpu_custom_call.1} parent=1 // pred_region
      _
    $region21: #{tpu_custom_call.1} parent=1 // pred_fallthru
      _
    // Predicated region
    $region22: #{tpu_custom_call.1} parent=1 // pred_check
      _
    $region23: #{tpu_custom_call.1} parent=1 // pred_check_branch
      %60 = sbr.rel (0) target = $region25
    $region24: #{tpu_custom_call.1} parent=1 // pred_region
      %s62 = ssub.s32 1024, 1024
      %63 = vsyncadd [#allocation9], %s62
      %s64 = sshll.u32 [#allocation8], 4
      %s65 = int_to_ptr.vmem [resolvable:$true] %s64
      %70 = dma.hbm_to_vmem [thread:$0]  %s5, 1024, %s65, [#allocation9], 64, 64, 4
    $region25: #{tpu_custom_call.1} parent=1 // pred_fallthru
      _
    // Predicated region
    $region26: #{tpu_custom_call.1} parent=1 // pred_check
      _
    $region27: #{tpu_custom_call.1} parent=1 // pred_check_branch
      %72 = sbr.rel (0) target = $region29
    $region28: #{tpu_custom_call.1} parent=1 // pred_region
      _
    $region29: #{tpu_custom_call.1} parent=1 // pred_fallthru
      _
    // Predicated region
    $region30: #{tpu_custom_call.1} parent=1 // pred_check
      _
    $region31: #{tpu_custom_call.1} parent=1 // pred_check_branch
      %74 = sbr.rel (0) target = $region33
    $region32: #{tpu_custom_call.1} parent=1 // pred_region
      _
    $region33: #{tpu_custom_call.1} parent=1 // pred_fallthru
      _
    // Predicated region
    $region34: #{tpu_custom_call.1} parent=1 // pred_check
      _
    $region35: #{tpu_custom_call.1} parent=1 // pred_check_branch
      %76 = sbr.rel (0) target = $region37
    $region36: #{tpu_custom_call.1} parent=1 // pred_region
      _
    $region37: #{tpu_custom_call.1} parent=1 // pred_fallthru
      _
    // Predicated region
    $region38: #{tpu_custom_call.1} parent=1 // pred_check
      _
    $region39: #{tpu_custom_call.1} parent=1 // pred_check_branch
      %78 = sbr.rel (0) target = $region41
    $region40: #{tpu_custom_call.1} parent=1 // pred_region
      %79 = dma.done [#allocation4], 256
    $region41: #{tpu_custom_call.1} parent=1 // pred_fallthru
      _
    // Predicated region
    $region42: #{tpu_custom_call.1} parent=1 // pred_check
      _
    $region43: #{tpu_custom_call.1} parent=1 // pred_check_branch
      %81 = sbr.rel (0) target = $region45
    $region44: #{tpu_custom_call.1} parent=1 // pred_region
      %82 = dma.done [#allocation6], 256
    $region45: #{tpu_custom_call.1} parent=1 // pred_fallthru
      _
    // Predicated region
    $region46: #{tpu_custom_call.1} parent=1 // pred_check
      _
    $region47: #{tpu_custom_call.1} parent=1 // pred_check_branch
      %84 = sbr.rel (0) target = $region49
    $region48: #{tpu_custom_call.1} parent=1 // pred_region
      %85 = dma.done [#allocation6], 1024
    $region49: #{tpu_custom_call.1} parent=1 // pred_fallthru
      _
    // Predicated region
    $region50: #{tpu_custom_call.1} parent=1 // pred_check
      _
    $region51: #{tpu_custom_call.1} parent=1 // pred_check_branch
      %87 = sbr.rel (0) target = $region53
    $region52: #{tpu_custom_call.1} parent=1 // pred_region
      %88 = dma.done [#allocation9], 1024
    $region53: #{tpu_custom_call.1} parent=1 // pred_fallthru
      _
    %v90 = vld [vmem:[#allocation3] sm:$0xff]
    %v91 = vld [vmem:[#allocation3 + $0x8] sm:$0xff]
    %v92 = vpack.c.bf16 %v91, %v90
    %v93 = vld [vmem:[#allocation5] sm:$0xf]
    %v94 = vld [vmem:[#allocation5 + $0x4] sm:$0xf]
    %v95 = vld [vmem:[#allocation5 + $0x8] sm:$0xf]
    %v96 = vld [vmem:[#allocation5 + $0xc] sm:$0xf]
    %v97 = vld [vmem:[%s2] sm:$0x1]
    %v99 = vlaneseq
    %v100 = vshrl.u32 %v99, 7
    %v101 = vsub.s32 0, %v100
    %v102 = vrot.slane %v97, %v101
    %v108 = vunpack.c.l.b16 %v93
    %v109 = vunpack.c.l.b16 %v94
    %v110 = vunpack.c.l.b16 %v95
    %v111 = vunpack.c.l.b16 %v96
    %v112 = vpack.c.b16 %v109, %v108
    %v113 = vpack.c.b16 %v111, %v110
    %vm116 = vcmask 261120
    %v118 = vsel %vm116, %v92, 0
    %120 = vmatprep.subr.bf16.mxu0 0
    %121 = vmatpush1.bf16.msra.mxu0 %v112
    %122 = vmatprep.subr.bf16.mxu0 0
    %123 = vmatpush1.bf16.msra.mxu0 %v113
    %124 = vmatprep.subr.bf16.mxu0 0
    %125 = vmatpush1.bf16.msra.mxu0 0
    %126 = vmatprep.subr.bf16.mxu0 0
    %127 = vmatpush1.bf16.msra.mxu0 0
    %128 = vmatprep.subr.bf16.mxu0 0
    %129 = vmatpush1.bf16.msra.mxu0 0
    %130 = vmatprep.subr.bf16.mxu0 0
    %131 = vmatpush1.bf16.msra.mxu0 0
    %132 = vmatprep.subr.bf16.mxu0 0
    %133 = vmatpush1.bf16.msra.mxu0 0
    %134 = vmatprep.subr.bf16.mxu0 0
    %135 = vmatpush1.bf16.msra.mxu0 0
    %136 = vmatprep.subr.bf16.mxu0 0
    %137 = vmatpush1.bf16.msra.mxu0 0
    %138 = vmatprep.subr.bf16.mxu0 0
    %139 = vmatpush1.bf16.msra.mxu0 0
    %140 = vmatprep.subr.bf16.mxu0 0
    %141 = vmatpush1.bf16.msra.mxu0 0
    %142 = vmatprep.subr.bf16.mxu0 0
    %143 = vmatpush1.bf16.msra.mxu0 0
    %144 = vmatprep.subr.bf16.mxu0 0
    %145 = vmatpush1.bf16.msra.mxu0 0
    %146 = vmatprep.subr.bf16.mxu0 0
    %147 = vmatpush1.bf16.msra.mxu0 0
    %148 = vmatprep.subr.bf16.mxu0 0
    %149 = vmatpush1.bf16.msra.mxu0 0
    %150 = vmatprep.subr.bf16.mxu0 0
    %151 = vmatpush1.bf16.msra.mxu0 0
    %152 = vmatprep.mubr.bf16.mxu0 0
    %153 = vmatmul.mubr.bf16.gmra.mrb[0].mxu0 %v118
    %v154 = vpop.f32.mrb[0].mxu0
    %v155 = vadd.f32 %v102, %v154
    %v156 = vpop.f32.mrb[0].mxu0
    %v157 = vpop.f32.mrb[0].mxu0
    %v158 = vadd.f32 %v102, %v157
    %v159 = vpop.f32.mrb[0].mxu0
    %160 = vdwg.mxu0
    %v161 = vmin.f32 %v155, 0.0
    %v162 = vmin.f32 %v158, 0.0
    %v163 = vmul.f32 %v161, 1.442695
    %v164 = vpow.pop %v163
    %v165 = vmul.f32 %v162, 1.442695
    %v166 = vpow.pop %v165
    %v167 = vsub.f32 %v164, 1.0
    %v168 = vsub.f32 %v166, 1.0
    %v169 = vmul.f32 %v167, 1.6732632
    %v170 = vmul.f32 %v168, 1.6732632
    %vm171 = vcmp.gt.f32.partialorder %v155, 0.0
    %vm172 = vcmp.gt.f32.partialorder %v158, 0.0
    %v173 = vsel %vm171, %v155, %v169
    %v174 = vsel %vm172, %v158, %v170
    %v175 = vmul.f32 %v173, 1.050701
    %v176 = vmul.f32 %v174, 1.050701
    %v177 = vpack.c.bf16 %v176, %v175
    %v178 = vld [vmem:[#allocation7] sm:$0xf]
    %v179 = vld [vmem:[#allocation7 + $0x4] sm:$0xf]
    %v180 = vld [vmem:[#allocation7 + $0x8] sm:$0xf]
    %v181 = vld [vmem:[#allocation7 + $0xc] sm:$0xf]
    %v182 = vld [vmem:[#allocation7 + $0x10] sm:$0xf]
    %v183 = vld [vmem:[#allocation7 + $0x14] sm:$0xf]
    %v184 = vld [vmem:[#allocation7 + $0x18] sm:$0xf]
    %v185 = vld [vmem:[#allocation7 + $0x1c] sm:$0xf]
    %v186 = vld [vmem:[#allocation7 + $0x20] sm:$0xf]
    %v187 = vld [vmem:[#allocation7 + $0x24] sm:$0xf]
    %v188 = vld [vmem:[#allocation7 + $0x28] sm:$0xf]
    %v189 = vld [vmem:[#allocation7 + $0x2c] sm:$0xf]
    %v190 = vld [vmem:[#allocation7 + $0x30] sm:$0xf]
    %v191 = vld [vmem:[#allocation7 + $0x34] sm:$0xf]
    %v192 = vld [vmem:[#allocation7 + $0x38] sm:$0xf]
    %v193 = vld [vmem:[#allocation7 + $0x3c] sm:$0xf]
    %v194 = vld [vmem:[%s4] sm:$0x1]
    %v196 = vlaneseq
    %v197 = vshrl.u32 %v196, 7
    %v198 = vsub.s32 0, %v197
    %v199 = vrot.slane %v194, %v198
    %v217 = vunpack.c.l.b16 %v178
    %v218 = vunpack.c.l.b16 %v179
    %v219 = vunpack.c.l.b16 %v180
    %v220 = vunpack.c.l.b16 %v181
    %v221 = vunpack.c.l.b16 %v182
    %v222 = vunpack.c.l.b16 %v183
    %v223 = vunpack.c.l.b16 %v184
    %v224 = vunpack.c.l.b16 %v185
    %v225 = vunpack.c.l.b16 %v186
    %v226 = vunpack.c.l.b16 %v187
    %v227 = vunpack.c.l.b16 %v188
    %v228 = vunpack.c.l.b16 %v189
    %v229 = vunpack.c.l.b16 %v190
    %v230 = vunpack.c.l.b16 %v191
    %v231 = vunpack.c.l.b16 %v192
    %v232 = vunpack.c.l.b16 %v193
    %v233 = vpack.c.b16 %v218, %v217
    %v234 = vpack.c.b16 %v220, %v219
    %v235 = vpack.c.b16 %v222, %v221
    %v236 = vpack.c.b16 %v224, %v223
    %v237 = vpack.c.b16 %v226, %v225
    %v238 = vpack.c.b16 %v228, %v227
    %v239 = vpack.c.b16 %v230, %v229
    %v240 = vpack.c.b16 %v232, %v231
    %249 = vmatprep.subr.bf16.mxu0 0
    %250 = vmatpush1.bf16.msra.mxu0 %v233
    %251 = vmatprep.subr.bf16.mxu0 0
    %252 = vmatpush1.bf16.msra.mxu0 %v234
    %253 = vmatprep.subr.bf16.mxu0 0
    %254 = vmatpush1.bf16.msra.mxu0 %v235
    %255 = vmatprep.subr.bf16.mxu0 0
    %256 = vmatpush1.bf16.msra.mxu0 %v236
    %257 = vmatprep.subr.bf16.mxu0 0
    %258 = vmatpush1.bf16.msra.mxu0 %v237
    %259 = vmatprep.subr.bf16.mxu0 0
    %260 = vmatpush1.bf16.msra.mxu0 %v238
    %261 = vmatprep.subr.bf16.mxu0 0
    %262 = vmatpush1.bf16.msra.mxu0 %v239
    %263 = vmatprep.subr.bf16.mxu0 0
    %264 = vmatpush1.bf16.msra.mxu0 %v240
    %265 = vmatprep.subr.bf16.mxu0 0
    %266 = vmatpush1.bf16.msra.mxu0 0
    %267 = vmatprep.subr.bf16.mxu0 0
    %268 = vmatpush1.bf16.msra.mxu0 0
    %269 = vmatprep.subr.bf16.mxu0 0
    %270 = vmatpush1.bf16.msra.mxu0 0
    %271 = vmatprep.subr.bf16.mxu0 0
    %272 = vmatpush1.bf16.msra.mxu0 0
    %273 = vmatprep.subr.bf16.mxu0 0
    %274 = vmatpush1.bf16.msra.mxu0 0
    %275 = vmatprep.subr.bf16.mxu0 0
    %276 = vmatpush1.bf16.msra.mxu0 0
    %277 = vmatprep.subr.bf16.mxu0 0
    %278 = vmatpush1.bf16.msra.mxu0 0
    %279 = vmatprep.subr.bf16.mxu0 0
    %280 = vmatpush1.bf16.msra.mxu0 0
    %281 = vmatprep.mubr.bf16.mxu0 0
    %282 = vmatmul.mubr.bf16.gmra.mrb[0].mxu0 %v177
    %v283 = vpop.f32.mrb[0].mxu0
    %v284 = vadd.f32 %v199, %v283
    %v285 = vpop.f32.mrb[0].mxu0
    %v286 = vpop.f32.mrb[0].mxu0
    %v287 = vadd.f32 %v199, %v286
    %v288 = vpop.f32.mrb[0].mxu0
    %289 = vdwg.mxu0
    %v290 = vmin.f32 %v284, 0.0
    %v291 = vmin.f32 %v287, 0.0
    %v292 = vmul.f32 %v290, 1.442695
    %v293 = vpow.pop %v292
    %v294 = vmul.f32 %v291, 1.442695
    %v295 = vpow.pop %v294
    %v296 = vsub.f32 %v293, 1.0
    %v297 = vsub.f32 %v295, 1.0
    %v298 = vmul.f32 %v296, 1.6732632
    %v299 = vmul.f32 %v297, 1.6732632
    %vm300 = vcmp.gt.f32.partialorder %v284, 0.0
    %vm301 = vcmp.gt.f32.partialorder %v287, 0.0
    %v302 = vsel %vm300, %v284, %v298
    %v303 = vsel %vm301, %v287, %v299
    %v304 = vmul.f32 %v302, 1.050701
    %v305 = vmul.f32 %v303, 1.050701
    %v306 = vpack.c.bf16 %v305, %v304
    %v307 = vld [vmem:[#allocation8] sm:$0xf]
    %v308 = vld [vmem:[#allocation8 + $0x4] sm:$0xf]
    %v309 = vld [vmem:[#allocation8 + $0x8] sm:$0xf]
    %v310 = vld [vmem:[#allocation8 + $0xc] sm:$0xf]
    %v311 = vld [vmem:[#allocation8 + $0x10] sm:$0xf]
    %v312 = vld [vmem:[#allocation8 + $0x14] sm:$0xf]
    %v313 = vld [vmem:[#allocation8 + $0x18] sm:$0xf]
    %v314 = vld [vmem:[#allocation8 + $0x1c] sm:$0xf]
    %v315 = vld [vmem:[#allocation8 + $0x20] sm:$0xf]
    %v316 = vld [vmem:[#allocation8 + $0x24] sm:$0xf]
    %v317 = vld [vmem:[#allocation8 + $0x28] sm:$0xf]
    %v318 = vld [vmem:[#allocation8 + $0x2c] sm:$0xf]
    %v319 = vld [vmem:[#allocation8 + $0x30] sm:$0xf]
    %v320 = vld [vmem:[#allocation8 + $0x34] sm:$0xf]
    %v321 = vld [vmem:[#allocation8 + $0x38] sm:$0xf]
    %v322 = vld [vmem:[#allocation8 + $0x3c] sm:$0xf]
    %v323 = vld [vmem:[%s6] sm:$0x1]
    %v325 = vlaneseq
    %v326 = vshrl.u32 %v325, 7
    %v327 = vsub.s32 0, %v326
    %v328 = vrot.slane %v323, %v327
    %v346 = vunpack.c.l.b16 %v307
    %v347 = vunpack.c.l.b16 %v308
    %v348 = vunpack.c.l.b16 %v309
    %v349 = vunpack.c.l.b16 %v310
    %v350 = vunpack.c.l.b16 %v311
    %v351 = vunpack.c.l.b16 %v312
    %v352 = vunpack.c.l.b16 %v313
    %v353 = vunpack.c.l.b16 %v314
    %v354 = vunpack.c.l.b16 %v315
    %v355 = vunpack.c.l.b16 %v316
    %v356 = vunpack.c.l.b16 %v317
    %v357 = vunpack.c.l.b16 %v318
    %v358 = vunpack.c.l.b16 %v319
    %v359 = vunpack.c.l.b16 %v320
    %v360 = vunpack.c.l.b16 %v321
    %v361 = vunpack.c.l.b16 %v322
    %v362 = vpack.c.b16 %v347, %v346
    %v363 = vpack.c.b16 %v349, %v348
    %v364 = vpack.c.b16 %v351, %v350
    %v365 = vpack.c.b16 %v353, %v352
    %v366 = vpack.c.b16 %v355, %v354
    %v367 = vpack.c.b16 %v357, %v356
    %v368 = vpack.c.b16 %v359, %v358
    %v369 = vpack.c.b16 %v361, %v360
    %378 = vmatprep.subr.bf16.mxu0 0
    %379 = vmatpush1.bf16.msra.mxu0 %v362
    %380 = vmatprep.subr.bf16.mxu0 0
    %381 = vmatpush1.bf16.msra.mxu0 %v363
    %382 = vmatprep.subr.bf16.mxu0 0
    %383 = vmatpush1.bf16.msra.mxu0 %v364
    %384 = vmatprep.subr.bf16.mxu0 0
    %385 = vmatpush1.bf16.msra.mxu0 %v365
    %386 = vmatprep.subr.bf16.mxu0 0
    %387 = vmatpush1.bf16.msra.mxu0 %v366
    %388 = vmatprep.subr.bf16.mxu0 0
    %389 = vmatpush1.bf16.msra.mxu0 %v367
    %390 = vmatprep.subr.bf16.mxu0 0
    %391 = vmatpush1.bf16.msra.mxu0 %v368
    %392 = vmatprep.subr.bf16.mxu0 0
    %393 = vmatpush1.bf16.msra.mxu0 %v369
    %394 = vmatprep.subr.bf16.mxu0 0
    %395 = vmatpush1.bf16.msra.mxu0 0
    %396 = vmatprep.subr.bf16.mxu0 0
    %397 = vmatpush1.bf16.msra.mxu0 0
    %398 = vmatprep.subr.bf16.mxu0 0
    %399 = vmatpush1.bf16.msra.mxu0 0
    %400 = vmatprep.subr.bf16.mxu0 0
    %401 = vmatpush1.bf16.msra.mxu0 0
    %402 = vmatprep.subr.bf16.mxu0 0
    %403 = vmatpush1.bf16.msra.mxu0 0
    %404 = vmatprep.subr.bf16.mxu0 0
    %405 = vmatpush1.bf16.msra.mxu0 0
    %406 = vmatprep.subr.bf16.mxu0 0
    %407 = vmatpush1.bf16.msra.mxu0 0
    %408 = vmatprep.subr.bf16.mxu0 0
    %409 = vmatpush1.bf16.msra.mxu0 0
    %410 = vmatprep.mubr.bf16.mxu0 0
    %411 = vmatmul.mubr.bf16.gmra.mrb[0].mxu0 %v306
    %v412 = vpop.f32.mrb[0].mxu0
    %v413 = vadd.f32 %v328, %v412
    %v414 = vpop.f32.mrb[0].mxu0
    %v415 = vpop.f32.mrb[0].mxu0
    %v416 = vadd.f32 %v328, %v415
    %v417 = vpop.f32.mrb[0].mxu0
    %418 = vdwg.mxu0
    %v419 = vmin.f32 %v413, 0.0
    %v420 = vmin.f32 %v416, 0.0
    %v421 = vmul.f32 %v419, 1.442695
    %v422 = vpow.pop %v421
    %v423 = vmul.f32 %v420, 1.442695
    %v424 = vpow.pop %v423
    %v425 = vsub.f32 %v422, 1.0
    %v426 = vsub.f32 %v424, 1.0
    %v427 = vmul.f32 %v425, 1.6732632
    %v428 = vmul.f32 %v426, 1.6732632
    %vm429 = vcmp.gt.f32.partialorder %v413, 0.0
    %vm430 = vcmp.gt.f32.partialorder %v416, 0.0
    %v431 = vsel %vm429, %v413, %v427
    %v432 = vsel %vm430, %v416, %v428
    %v433 = vmul.f32 %v431, 1.050701
    %v434 = vmul.f32 %v432, 1.050701
    %v435 = vld [vmem:[%s7] sm:$0x1]
    %v437 = vlaneseq
    %v438 = vshrl.u32 %v437, 7
    %v439 = vsub.s32 0, %v438
    %v440 = vrot.slane %v435, %v439
    %v442 = vmul.f32 %v433, %v440
    %v443 = vmul.f32 %v434, %v440
    %444 = vadd.xlane.f32.xlu0 %v442
    %v445 = vpop.xlane.xlu0 %444
    %446 = vadd.xlane.f32.xlu0 %v443
    %v447 = vpop.xlane.xlu0 %446
    %v448 = vld [vmem:[#allocation2] sm:$0x1]
    %v450 = vlaneseq
    %v451 = vshrl.u32 %v450, 7
    %v452 = vsub.s32 0, %v451
    %v453 = vrot.slane %v448, %v452
    %v455 = vadd.f32 %v445, %v453
    %v456 = vadd.f32 %v447, %v453
    %vm457 = vcmask 7168
    %458 = vst.msk [vmem:[%s9] sm:$0xff] %vm457, %v455
    %459 = vst.msk [vmem:[%s9 + $0x8] sm:$0xff] %vm457, %v456
    // Predicated region
    $region54: #{tpu_custom_call.1} parent=1 // pred_check
      _
    $region55: #{tpu_custom_call.1} parent=1 // pred_check_branch
      %461 = sbr.rel (0) target = $region57
    $region56: #{tpu_custom_call.1} parent=1 // pred_region
      _
    $region57: #{tpu_custom_call.1} parent=1 // pred_fallthru
      _
    // Predicated region
    $region58: #{tpu_custom_call.1} parent=1 // pred_check
      _
    $region59: #{tpu_custom_call.1} parent=1 // pred_check_branch
      %463 = sbr.rel (0) target = $region61
    $region60: #{tpu_custom_call.1} parent=1 // pred_region
      _
    $region61: #{tpu_custom_call.1} parent=1 // pred_fallthru
      _
    %464 = vsyncpa [#allocation4], 1
    %465 = vsyncpa [#allocation6], 1
    %466 = vsyncpa [#allocation9], 1

</llo_original>
